<compile_context>
chip_gen: v6e
topology: v6e:2x2x1
jax: 0.10.0
libtpu: 0.0.40
codegen_flags: <defaults>
</compile_context>

<pallas_src>
import jax
import jax.numpy as jnp
from jax.experimental import pallas as pl
from jax.experimental.pallas import tpu as pltpu

B, D, H = 256, 16, 32     # batch, system dimension, hidden width
TB = 128                  # batch rows per grid block (sublane-aligned, 2 blocks)
PAD_F = 128               # lane-dense padded output width (>= D + 1)


def _anode_dynamics_kernel(t_ref, state_ref, w1_ref, w2c_ref, vec_ref, out_ref):
    t = t_ref[0, 0]                                   # scalar time (SMEM)
    xs = state_ref[:, :D]                             # [TB, D]  (drop dlogp col)

    w1 = w1_ref[...]                                  # [D, H]
    b1 = vec_ref[0:1, :H]                             # [1, H]
    wt = vec_ref[1:2, :H]                             # [1, H]
    bias = vec_ref[2:3, :]                            # [1, PAD_F]  (b2 | 0)
    w2_pad = w2c_ref[0]                               # [H, PAD_F]  (W2   | 0)
    negc_pad = w2c_ref[1]                             # [H, PAD_F]  (-c at col D)

    # hidden layer (MXU matmul + VPU add + EUP tanh)
    pre = jnp.dot(xs, w1, preferred_element_type=jnp.float32) + b1 + t * wt
    h = jnp.tanh(pre)                                 # [TB, H]

    # dx, -div and zero padding produced lane-dense directly on the MXU:
    #   out[:, :D]   = h @ W2 + b2
    #   out[:, D]    = -(1 - h^2) @ c
    #   out[:, D+1:] = 0
    out = jnp.dot(h, w2_pad, preferred_element_type=jnp.float32)
    out = out + jnp.dot(1.0 - h * h, negc_pad, preferred_element_type=jnp.float32)
    out_ref[...] = out + bias                         # single full-block store


def anode_dynamics(t, state, params):
    """Pallas-backed AnodeDynamics.forward(t, state) -> [B, D+1]."""
    w1, b1, wt, w2, b2 = params
    n_batch, n_feat = state.shape
    assert n_feat == D + 1 and n_batch % TB == 0

    # Tiny parameter packing (glue, not hot path):
    #   c_j = sum_i W1[i, j] * W2[j, i]   (exact-divergence coefficients)
    c = jnp.sum(w1 * w2.T, axis=0)                               # [H]
    w2_pad = jnp.zeros((H, PAD_F), jnp.float32).at[:, :D].set(w2)
    negc_pad = jnp.zeros((H, PAD_F), jnp.float32).at[:, D].set(-c)
    w2c_pack = jnp.stack([w2_pad, negc_pad], axis=0)             # [2, H, PAD_F]

    vec_pack = jnp.zeros((3, PAD_F), jnp.float32)
    vec_pack = vec_pack.at[0, :H].set(b1.reshape(H))             # b1
    vec_pack = vec_pack.at[1, :H].set(wt.reshape(H))             # wt
    vec_pack = vec_pack.at[2, :D].set(b2.reshape(D))             # b2 (bias row)

    t_arr = jnp.reshape(jnp.asarray(t, jnp.float32), (1, 1))

    out_padded = pl.pallas_call(
        _anode_dynamics_kernel,
        out_shape=jax.ShapeDtypeStruct((n_batch, PAD_F), jnp.float32),
        grid=(n_batch // TB,),
        in_specs=[
            pl.BlockSpec((1, 1), lambda i: (0, 0),
                         memory_space=pltpu.MemorySpace.SMEM),   # t scalar
            pl.BlockSpec((TB, D + 1), lambda i: (i, 0)),         # state tile
            pl.BlockSpec((D, H), lambda i: (0, 0)),              # W1
            pl.BlockSpec((2, H, PAD_F), lambda i: (0, 0, 0)),    # [W2 | -c] packed
            pl.BlockSpec((3, PAD_F), lambda i: (0, 0)),          # b1 / wt / bias
        ],
        out_specs=pl.BlockSpec((TB, PAD_F), lambda i: (i, 0)),
        compiler_params=pltpu.CompilerParams(
            dimension_semantics=("parallel",)),                  # v7x: 2 TCs
    )(t_arr, state, w1, w2c_pack, vec_pack)

    # slice the lane padding back off -> [B, D+1], matching the module output
    return out_padded[:, :D + 1]


def _reference(t, state, params):
    """Pure-JAX reference of the same forward pass."""
    w1, b1, wt, w2, b2 = params
    xs = state[:, :D]
    h = jnp.tanh(xs @ w1 + b1 + t * wt)
    dx = h @ w2 + b2
    c = jnp.sum(w1 * w2.T, axis=0, keepdims=True)
    div = jnp.sum((1.0 - h * h) * c, axis=-1, keepdims=True)
    return jnp.concatenate([dx, -div], axis=-1)


if __name__ == "__main__":
    key = jax.random.PRNGKey(0)
    k_state, k_w1, k_b1, k_wt, k_w2, k_b2 = jax.random.split(key, 6)

    # Deterministic synthetic parameters (shapes implied by the dynamics above).
    w1 = 0.1 * jax.random.normal(k_w1, (D, H), dtype=jnp.float32)
    b1 = 0.1 * jax.random.normal(k_b1, (1, H), dtype=jnp.float32)
    wt = 0.1 * jax.random.normal(k_wt, (1, H), dtype=jnp.float32)
    w2 = 0.1 * jax.random.normal(k_w2, (H, D), dtype=jnp.float32)
    b2 = 0.1 * jax.random.normal(k_b2, (1, D), dtype=jnp.float32)
    params = (w1, b1, wt, w2, b2)

    # ANODE concatenated state: [xs | dlogp], shape [B, D+1]
    state = jax.random.normal(k_state, (B, D + 1), dtype=jnp.float32)
    t = jnp.float32(0.3)

    out = jax.block_until_ready(anode_dynamics(t, state, params))

    ref = _reference(t, state, params)
    assert out.shape == state.shape and out.dtype == jnp.float32
    assert jnp.allclose(out, ref, atol=2e-5, rtol=1e-4), "mismatch vs reference"

    print("KERNEL_OK")
</pallas_src>

<mosaic_0001>
module attributes {stable_mosaic.version = 11 : i64} {
  func.func @_anode_dynamics_kernel(%arg0: i32, %arg1: memref<1x1xf32, #tpu.memory_space<smem>>, %arg2: memref<128x17xf32, #tpu.memory_space<vmem>>, %arg3: memref<16x32xf32, #tpu.memory_space<vmem>>, %arg4: memref<2x32x128xf32, #tpu.memory_space<vmem>>, %arg5: memref<3x128xf32, #tpu.memory_space<vmem>>, %arg6: memref<128x128xf32, #tpu.memory_space<vmem>>) attributes {dimension_semantics = [#tpu.dimension_semantics<parallel>], iteration_bounds = array<i64: 2>, scalar_prefetch = 0 : i64, scratch_operands = 0 : i64, tpu.core_type = #tpu.core_type<tc>, window_params = [{transform_indices = @transform_0, window_bounds = array<i64: 1, 1>}, {transform_indices = @transform_1, window_bounds = array<i64: 128, 17>}, {pipeline_mode = #tpu.pipeline_mode<synchronous>, transform_indices = @transform_2, window_bounds = array<i64: 16, 32>}, {pipeline_mode = #tpu.pipeline_mode<synchronous>, transform_indices = @transform_3, window_bounds = array<i64: 2, 32, 128>}, {pipeline_mode = #tpu.pipeline_mode<synchronous>, transform_indices = @transform_4, window_bounds = array<i64: 3, 128>}, {transform_indices = @transform_5, window_bounds = array<i64: 128, 128>}]} {
    %c0 = arith.constant 0 : index
    %c0_0 = arith.constant 0 : index
    %0 = memref.load %arg1[%c0, %c0_0] : memref<1x1xf32, #tpu.memory_space<smem>>
    %c0_1 = arith.constant 0 : index
    %c0_2 = arith.constant 0 : index
    %1 = vector.load %arg2[%c0_1, %c0_2] : memref<128x17xf32, #tpu.memory_space<vmem>>, vector<128x16xf32>
    %c0_3 = arith.constant 0 : index
    %c0_4 = arith.constant 0 : index
    %2 = vector.load %arg3[%c0_3, %c0_4] : memref<16x32xf32, #tpu.memory_space<vmem>>, vector<16x32xf32>
    %c0_5 = arith.constant 0 : index
    %c0_6 = arith.constant 0 : index
    %3 = vector.load %arg5[%c0_5, %c0_6] : memref<3x128xf32, #tpu.memory_space<vmem>>, vector<1x32xf32>
    %c1 = arith.constant 1 : index
    %c0_7 = arith.constant 0 : index
    %4 = vector.load %arg5[%c1, %c0_7] : memref<3x128xf32, #tpu.memory_space<vmem>>, vector<1x32xf32>
    %c2 = arith.constant 2 : index
    %c0_8 = arith.constant 0 : index
    %5 = vector.load %arg5[%c2, %c0_8] : memref<3x128xf32, #tpu.memory_space<vmem>>, vector<1x128xf32>
    %c0_9 = arith.constant 0 : index
    %c0_10 = arith.constant 0 : index
    %c0_11 = arith.constant 0 : index
    %6 = vector.load %arg4[%c0_9, %c0_10, %c0_11] : memref<2x32x128xf32, #tpu.memory_space<vmem>>, vector<1x32x128xf32>
    %7 = vector.shape_cast %6 : vector<1x32x128xf32> to vector<32x128xf32>
    %c1_12 = arith.constant 1 : index
    %c0_13 = arith.constant 0 : index
    %c0_14 = arith.constant 0 : index
    %8 = vector.load %arg4[%c1_12, %c0_13, %c0_14] : memref<2x32x128xf32, #tpu.memory_space<vmem>>, vector<1x32x128xf32>
    %9 = vector.shape_cast %8 : vector<1x32x128xf32> to vector<32x128xf32>
    %cst = arith.constant dense<0.000000e+00> : vector<128x32xf32>
    %10 = tpu.matmul %1, %2, %cst {dimension_numbers = #tpu.dot_dimension_numbers<[1], [0], [0], [1], [0, 0, 1, 1], [], []>} : vector<128x16xf32>, vector<16x32xf32>, vector<128x32xf32> -> vector<128x32xf32>
    %11 = vector.broadcast %3 : vector<1x32xf32> to vector<128x32xf32>
    %12 = arith.addf %10, %11 : vector<128x32xf32>
    %13 = vector.broadcast %0 : f32 to vector<1x32xf32>
    %14 = arith.mulf %13, %4 : vector<1x32xf32>
    %15 = vector.broadcast %14 : vector<1x32xf32> to vector<128x32xf32>
    %16 = arith.addf %12, %15 : vector<128x32xf32>
    %17 = math.tanh %16 : vector<128x32xf32>
    %cst_15 = arith.constant dense<0.000000e+00> : vector<128x128xf32>
    %18 = tpu.matmul %17, %7, %cst_15 {dimension_numbers = #tpu.dot_dimension_numbers<[1], [0], [0], [1], [0, 0, 1, 1], [], []>} : vector<128x32xf32>, vector<32x128xf32>, vector<128x128xf32> -> vector<128x128xf32>
    %19 = arith.mulf %17, %17 : vector<128x32xf32>
    %cst_16 = arith.constant 1.000000e+00 : f32
    %20 = vector.broadcast %cst_16 : f32 to vector<128x32xf32>
    %21 = arith.subf %20, %19 : vector<128x32xf32>
    %cst_17 = arith.constant dense<0.000000e+00> : vector<128x128xf32>
    %22 = tpu.matmul %21, %9, %cst_17 {dimension_numbers = #tpu.dot_dimension_numbers<[1], [0], [0], [1], [0, 0, 1, 1], [], []>} : vector<128x32xf32>, vector<32x128xf32>, vector<128x128xf32> -> vector<128x128xf32>
    %23 = arith.addf %18, %22 : vector<128x128xf32>
    %24 = vector.broadcast %5 : vector<1x128xf32> to vector<128x128xf32>
    %25 = arith.addf %23, %24 : vector<128x128xf32>
    %c0_18 = arith.constant 0 : index
    %c0_19 = arith.constant 0 : index
    %26 = vector.load %arg6[%c0_18, %c0_19] : memref<128x128xf32, #tpu.memory_space<vmem>>, vector<128x128xf32>
    tpu.vector_store %arg6[%c0_18, %c0_19], %25 {strides = array<i32>} : memref<128x128xf32, #tpu.memory_space<vmem>>, vector<128x128xf32>,
    return
  }
  func.func @transform_0(%arg0: i32) -> (i32, i32) {
    %c0_i32 = arith.constant 0 : i32
    %c0_i32_0 = arith.constant 0 : i32
    %c0_i32_1 = arith.constant 0 : i32
    return %c0_i32, %c0_i32_0 : i32, i32
  }
  func.func @transform_1(%arg0: i32) -> (i32, i32) {
    %c0_i32 = arith.constant 0 : i32
    %c0_i32_0 = arith.constant 0 : i32
    return %arg0, %c0_i32 : i32, i32
  }
  func.func @transform_2(%arg0: i32) -> (i32, i32) {
    %c0_i32 = arith.constant 0 : i32
    %c0_i32_0 = arith.constant 0 : i32
    %c0_i32_1 = arith.constant 0 : i32
    return %c0_i32, %c0_i32_0 : i32, i32
  }
  func.func @transform_3(%arg0: i32) -> (i32, i32, i32) {
    %c0_i32 = arith.constant 0 : i32
    %c0_i32_0 = arith.constant 0 : i32
    %c0_i32_1 = arith.constant 0 : i32
    %c0_i32_2 = arith.constant 0 : i32
    return %c0_i32, %c0_i32_0, %c0_i32_1 : i32, i32, i32
  }
  func.func @transform_4(%arg0: i32) -> (i32, i32) {
    %c0_i32 = arith.constant 0 : i32
    %c0_i32_0 = arith.constant 0 : i32
    %c0_i32_1 = arith.constant 0 : i32
    return %c0_i32, %c0_i32_0 : i32, i32
  }
  func.func @transform_5(%arg0: i32) -> (i32, i32) {
    %c0_i32 = arith.constant 0 : i32
    %c0_i32_0 = arith.constant 0 : i32
    return %arg0, %c0_i32 : i32, i32
  }
}

</mosaic_0001>

<llo_original>
// kernel: tpu_custom_call.1
$region0: #{tpu_custom_call.1}
  #allocation0 [shape = 'u32[]', space=smem, size = 0x4, offset = 0x4, fixed_abs, tag = 'smem constant byte address 0x4 - core index']
  #allocation1 [shape = 'u32[144,128]{1,0:T(1,128)}', space=vmem, size = 0x12000, scoped, tag = 'internal scratch']
  #allocation2 [shape = 'f32[1,1]{1,0:T(1,128)S(6)}', space=smem, size = 0x200, scoped, tag = 'scoped memory for tpu_custom_call.1']
  %s0 = inlined_call_operand.<no memory space> [shape: f32[1,1], index: 0, kind: input, shape index: {}]
  %s1 = inlined_call_operand.vmem [shape: f32[256,17], index: 1, kind: input, shape index: {}]
  %s2 = inlined_call_operand.vmem [shape: f32[16,32], index: 2, kind: input, shape index: {}]
  %s3 = inlined_call_operand.vmem [shape: f32[2,32,128], index: 3, kind: input, shape index: {}]
  %s4 = inlined_call_operand.vmem [shape: f32[3,128], index: 4, kind: input, shape index: {}]
  %s5 = inlined_call_operand.hbm [shape: f32[256,128], index: 5, kind: output, shape index: {}]
  %s6 = sld [smem:[#allocation0]]
  $region53: #{tpu_custom_call.1} parent=0
    _
  %s8 = ssub.s32 1, %s6
  %s9 = scalar_select 0, %s8, %s6
  %10 = sst [smem:[#allocation2]] %s0
  $region1: #{tpu_custom_call.1} parent=0
    #allocation3 [shape = 'u8[131072]{0}', space=vmem, size = 0x20000, scoped, tag = 'output window, operand 0']
    #allocation4 [shape = 's32[2]{0}', space=sflag, size = 0x8, scoped, tag = 'scoped memory for tpu_custom_call.1']
    %11 = vsyncpa [#allocation4], 0
    %s12 = scalar_lea.sflag [#allocation4], 1
    %13 = vsyncpa %s12, 0
    loop: start=0, step=1, limit=4
    $region2: #{tpu_custom_call.1} parent=1 // loop_pre_header
      _
    $region3: #{tpu_custom_call.1} parent=1 // loop_header
      %s15 = sphi 0, %s19
      %p16 = scmp.ge.s32.totalorder %s15, 4
      %s23 = sphi 0, %s23
      %s25 = sphi 0, %s23
      %s26 = sphi 0, %s25
      %s40 = sphi 0, %s26
      %s46 = sphi 0, %s48
      %s49 = sphi 0, %s46
      %s50 = sphi 0, %s49
      %s66 = sphi 0, %s50
      %s70 = sphi 0, %s70
      %s72 = sphi 0, %s70
      %s73 = sphi 0, %s72
      %s87 = sphi 0, %s73
      %s91 = sphi 0, %s91
      %s93 = sphi 0, %s91
      %s94 = sphi 0, %s93
      %s108 = sphi 0, %s94
      %s112 = sphi 0, %s112
      %s114 = sphi 0, %s112
      %s115 = sphi 0, %s114
      %s129 = sphi 0, %s115
      %s135 = sphi 0, %s137
      %s138 = sphi 0, %s135
      %s139 = sphi 0, %s138
      %s155 = sphi 0, %s139
    $region4: #{tpu_custom_call.1} parent=1 // loop_header_branch
      %18 = sbr.rel (%p16) target = $region8
    $region5: #{tpu_custom_call.1} parent=1 // loop_body
      %s20 = ssub.s32 %s15, 1
      %s21 = ssub.s32 %s15, 2
      %s22 = sadd.s32 %s15, 1
      %s24 = sadd.s32 %s23, 1
      %p27 = scmp.eq.s32.totalorder %s15, 1
      %p28 = scmp.ne.s32.totalorder %s23, %s25
      %p29 = scmp.eq.s32.totalorder %s15, 0
      %p30 = por %p28, %p29
      %p31 = scmp.ne.s32.totalorder %s23, %s25
      %p32 = scmp.eq.s32.totalorder %s20, 1
      %p33 = por %p31, %p32
      %p34 = scmp.ne.s32.totalorder %s25, %s26
      %p35 = scmp.eq.s32.totalorder %s20, 0
      %p36 = por %p34, %p35
      %p37 = scmp.ne.s32.totalorder %s25, %s26
      %p38 = scmp.eq.s32.totalorder %s21, 1
      %p39 = por %p37, %p38
      %p41 = scmp.ne.s32.totalorder %s26, %s40
      %p42 = scmp.eq.s32.totalorder %s21, 0
      %p43 = por %p41, %p42
      %s44 = ssub.s32 %s15, %s22
      %p45 = scmp.eq.s32.totalorder %s44, 0
      %s47 = sadd.s32 %s46, 1
      %s48 = scalar_select %p45, %s46, %s47
      %p51 = pneg %p45
      %p52 = scmp.eq.s32.totalorder %s15, 1
      %p53 = por %p51, %p52
      %p54 = scmp.ne.s32.totalorder %s46, %s49
      %p55 = scmp.eq.s32.totalorder %s15, 0
      %p56 = por %p54, %p55
      %p57 = scmp.ne.s32.totalorder %s46, %s49
      %p58 = scmp.eq.s32.totalorder %s20, 1
      %p59 = por %p57, %p58
      %p60 = scmp.ne.s32.totalorder %s49, %s50
      %p61 = scmp.eq.s32.totalorder %s20, 0
      %p62 = por %p60, %p61
      %p63 = scmp.ne.s32.totalorder %s49, %s50
      %p64 = scmp.eq.s32.totalorder %s21, 1
      %p65 = por %p63, %p64
      %p67 = scmp.ne.s32.totalorder %s50, %s66
      %p68 = scmp.eq.s32.totalorder %s21, 0
      %p69 = por %p67, %p68
      %s71 = sadd.s32 %s70, 1
      %p74 = scmp.eq.s32.totalorder %s15, 1
      %p75 = scmp.ne.s32.totalorder %s70, %s72
      %p76 = scmp.eq.s32.totalorder %s15, 0
      %p77 = por %p75, %p76
      %p78 = scmp.ne.s32.totalorder %s70, %s72
      %p79 = scmp.eq.s32.totalorder %s20, 1
      %p80 = por %p78, %p79
      %p81 = scmp.ne.s32.totalorder %s72, %s73
      %p82 = scmp.eq.s32.totalorder %s20, 0
      %p83 = por %p81, %p82
      %p84 = scmp.ne.s32.totalorder %s72, %s73
      %p85 = scmp.eq.s32.totalorder %s21, 1
      %p86 = por %p84, %p85
      %p88 = scmp.ne.s32.totalorder %s73, %s87
      %p89 = scmp.eq.s32.totalorder %s21, 0
      %p90 = por %p88, %p89
      %s92 = sadd.s32 %s91, 1
      %p95 = scmp.eq.s32.totalorder %s15, 1
      %p96 = scmp.ne.s32.totalorder %s91, %s93
      %p97 = scmp.eq.s32.totalorder %s15, 0
      %p98 = por %p96, %p97
      %p99 = scmp.ne.s32.totalorder %s91, %s93
      %p100 = scmp.eq.s32.totalorder %s20, 1
      %p101 = por %p99, %p100
      %p102 = scmp.ne.s32.totalorder %s93, %s94
      %p103 = scmp.eq.s32.totalorder %s20, 0
      %p104 = por %p102, %p103
      %p105 = scmp.ne.s32.totalorder %s93, %s94
      %p106 = scmp.eq.s32.totalorder %s21, 1
      %p107 = por %p105, %p106
      %p109 = scmp.ne.s32.totalorder %s94, %s108
      %p110 = scmp.eq.s32.totalorder %s21, 0
      %p111 = por %p109, %p110
      %s113 = sadd.s32 %s112, 1
      %p116 = scmp.eq.s32.totalorder %s15, 1
      %p117 = scmp.ne.s32.totalorder %s112, %s114
      %p118 = scmp.eq.s32.totalorder %s15, 0
      %p119 = por %p117, %p118
      %p120 = scmp.ne.s32.totalorder %s112, %s114
      %p121 = scmp.eq.s32.totalorder %s20, 1
      %p122 = por %p120, %p121
      %p123 = scmp.ne.s32.totalorder %s114, %s115
      %p124 = scmp.eq.s32.totalorder %s20, 0
      %p125 = por %p123, %p124
      %p126 = scmp.ne.s32.totalorder %s114, %s115
      %p127 = scmp.eq.s32.totalorder %s21, 1
      %p128 = por %p126, %p127
      %p130 = scmp.ne.s32.totalorder %s115, %s129
      %p131 = scmp.eq.s32.totalorder %s21, 0
      %p132 = por %p130, %p131
      %s133 = ssub.s32 %s15, %s22
      %p134 = scmp.eq.s32.totalorder %s133, 0
      %s136 = sadd.s32 %s135, 1
      %s137 = scalar_select %p134, %s135, %s136
      %p140 = pneg %p134
      %p141 = scmp.eq.s32.totalorder %s15, 1
      %p142 = por %p140, %p141
      %p143 = scmp.ne.s32.totalorder %s135, %s138
      %p144 = scmp.eq.s32.totalorder %s15, 0
      %p145 = por %p143, %p144
      %p146 = scmp.ne.s32.totalorder %s135, %s138
      %p147 = scmp.eq.s32.totalorder %s20, 1
      %p148 = por %p146, %p147
      %p149 = scmp.ne.s32.totalorder %s138, %s139
      %p150 = scmp.eq.s32.totalorder %s20, 0
      %p151 = por %p149, %p150
      %p152 = scmp.ne.s32.totalorder %s138, %s139
      %p153 = scmp.eq.s32.totalorder %s21, 1
      %p154 = por %p152, %p153
      %p156 = scmp.ne.s32.totalorder %s139, %s155
      %p157 = scmp.eq.s32.totalorder %s21, 0
      %p158 = por %p156, %p157
      %p159 = scmp.le.s32.totalorder 1, %s15
      %p160 = scmp.lt.s32.totalorder %s15, 3
      %p161 = pnand %p159, %p160
      %p162 = pneg %p161
      // Predicated region
      $region9: #{tpu_custom_call.1} parent=5 // pred_check
        _
      $region10: #{tpu_custom_call.1} parent=5 // pred_check_branch
        %164 = sbr.rel (%p161) target = $region12
      $region11: #{tpu_custom_call.1} parent=5 // pred_region
        %s165 = ssub.s32 %s15, 1
        // Predicated region
        $region13: #{tpu_custom_call.1} parent=11 // pred_check
          %p166 = pneg %p36
        $region14: #{tpu_custom_call.1} parent=11 // pred_check_branch
          %168 = sbr.rel (%p166) target = $region16
        $region15: #{tpu_custom_call.1} parent=11 // pred_region
          _
        $region16: #{tpu_custom_call.1} parent=11 // pred_fallthru
          _
        // Predicated region
        $region17: #{tpu_custom_call.1} parent=11 // pred_check
          %p169 = pneg %p83
        $region18: #{tpu_custom_call.1} parent=11 // pred_check_branch
          %171 = sbr.rel (%p169) target = $region20
        $region19: #{tpu_custom_call.1} parent=11 // pred_region
          _
        $region20: #{tpu_custom_call.1} parent=11 // pred_fallthru
          _
        // Predicated region
        $region21: #{tpu_custom_call.1} parent=11 // pred_check
          %p172 = pneg %p104
        $region22: #{tpu_custom_call.1} parent=11 // pred_check_branch
          %174 = sbr.rel (%p172) target = $region24
        $region23: #{tpu_custom_call.1} parent=11 // pred_region
          _
        $region24: #{tpu_custom_call.1} parent=11 // pred_fallthru
          _
        // Predicated region
        $region25: #{tpu_custom_call.1} parent=11 // pred_check
          %p175 = pneg %p125
        $region26: #{tpu_custom_call.1} parent=11 // pred_check_branch
          %177 = sbr.rel (%p175) target = $region28
        $region27: #{tpu_custom_call.1} parent=11 // pred_region
          _
        $region28: #{tpu_custom_call.1} parent=11 // pred_fallthru
          _
      $region12: #{tpu_custom_call.1} parent=5 // pred_fallthru
        _
      %p178 = scmp.lt.s32.totalorder %s15, 2
      // Predicated region
      $region29: #{tpu_custom_call.1} parent=5 // pred_check
        %p179 = pneg %p178
      $region30: #{tpu_custom_call.1} parent=5 // pred_check_branch
        %181 = sbr.rel (%p179) target = $region32
      $region31: #{tpu_custom_call.1} parent=5 // pred_region
        // Predicated region
        $region33: #{tpu_custom_call.1} parent=31 // pred_check
          %p182 = pneg %p56
        $region34: #{tpu_custom_call.1} parent=31 // pred_check_branch
          %184 = sbr.rel (%p182) target = $region36
        $region35: #{tpu_custom_call.1} parent=31 // pred_region
          %s185 = smul.u32 16, %s15
          %p186 = scmp.lt.s32.totalorder %s185, 31
          %s187 = scalar_select %p186, %s185, 31
          %s188 = smul.addr %s187, 8
          %s189 = scalar_lea.vmem %s1, %s188
          %s190 = smul.u32 16, %s15
        $region36: #{tpu_custom_call.1} parent=31 // pred_fallthru
          _
      $region32: #{tpu_custom_call.1} parent=5 // pred_fallthru
        _
      %p191 = scmp.le.s32.totalorder 1, %s15
      %p192 = scmp.lt.s32.totalorder %s15, 3
      %p193 = pnand %p191, %p192
      %p194 = pneg %p193
      // Predicated region
      $region37: #{tpu_custom_call.1} parent=5 // pred_check
        _
      $region38: #{tpu_custom_call.1} parent=5 // pred_check_branch
        %196 = sbr.rel (%p193) target = $region40
      $region39: #{tpu_custom_call.1} parent=5 // pred_region
        %s197 = ssub.s32 %s15, 1
        %p198 = pneg %p36
        %p199 = pneg %p33
        %s200 = smul.u32 16, %s20
        %p201 = scmp.lt.s32.totalorder %s200, 31
        %s202 = scalar_select %p201, %s200, 31
        %s203 = smul.addr %s202, 8
        %s204 = scalar_lea.vmem %s1, %s203
        %p205 = pneg %p62
        %p206 = pneg %p59
        %p207 = pneg %p83
        %p208 = pneg %p80
        %p209 = pneg %p104
        %p210 = pneg %p101
        %p211 = pneg %p125
        %p212 = pneg %p122
        %p213 = pneg %p151
        %p214 = pneg %p148
        %s215 = sand.u32 %s138, 1
        %s216 = scalar_lea.sflag [#allocation4], %s215
        %s217 = sand.u32 %s138, 1
        %s218 = smul.addr %s217, 128
        %s219 = scalar_lea.vmem [#allocation3], %s218
        %s220 = smul.u32 16, %s20
        %p221 = scmp.lt.s32.totalorder %s220, 31
        %s222 = scalar_select %p221, %s220, 31
        %s223 = smul.addr %s222, 8
        %s224 = scalar_lea.vmem %s1, %s223
        %s225 = smul.u32 16, %s20
        %s226 = smul.u32 16, %s20
        %s227 = sld [smem:[#allocation2]]
        %v228 = vld [vmem:[%s224] sm:$0xff]
        %v229 = vld [vmem:[%s224 + $0x8] sm:$0xff]
        %v230 = vld [vmem:[%s224 + $0x10] sm:$0xff]
        %v231 = vld [vmem:[%s224 + $0x18] sm:$0xff]
        %v232 = vld [vmem:[%s224 + $0x20] sm:$0xff]
        %v233 = vld [vmem:[%s224 + $0x28] sm:$0xff]
        %v234 = vld [vmem:[%s224 + $0x30] sm:$0xff]
        %v235 = vld [vmem:[%s224 + $0x38] sm:$0xff]
        %v236 = vld [vmem:[%s224 + $0x40] sm:$0xff]
        %v237 = vld [vmem:[%s224 + $0x48] sm:$0xff]
        %v238 = vld [vmem:[%s224 + $0x50] sm:$0xff]
        %v239 = vld [vmem:[%s224 + $0x58] sm:$0xff]
        %v240 = vld [vmem:[%s224 + $0x60] sm:$0xff]
        %v241 = vld [vmem:[%s224 + $0x68] sm:$0xff]
        %v242 = vld [vmem:[%s224 + $0x70] sm:$0xff]
        %v243 = vld [vmem:[%s224 + $0x78] sm:$0xff]
        %v244 = vld [vmem:[%s2] sm:$0xff]
        %v245 = vld [vmem:[%s2 + $0x8] sm:$0xff]
        %v246 = vld [vmem:[%s4] sm:$0x1]
        %v247 = vld [vmem:[%s4 + $0x1] sm:$0x1]
        %v248 = vld [vmem:[%s4 + $0x2] sm:$0x1]
        %v249 = vld [vmem:[%s3] sm:$0xff]
        %v250 = vld [vmem:[%s3 + $0x8] sm:$0xff]
        %v251 = vld [vmem:[%s3 + $0x10] sm:$0xff]
        %v252 = vld [vmem:[%s3 + $0x18] sm:$0xff]
        %s253 = scalar_lea.vmem %s3, 32
        %v254 = vld [vmem:[%s253] sm:$0xff]
        %v255 = vld [vmem:[%s253 + $0x8] sm:$0xff]
        %v256 = vld [vmem:[%s253 + $0x10] sm:$0xff]
        %v257 = vld [vmem:[%s253 + $0x18] sm:$0xff]
        %v258 = vlaneseq
        %v259 = vshrl.u32 %v258, 7
        %v260 = vsub.s32 0, %v259
        %v261 = vrot.slane %v246, %v260
        %vm262 = vcmask 130048
        %v264 = vsel %vm262, %v228, 0
        %v267 = vsel %vm262, %v229, 0
        %v270 = vsel %vm262, %v230, 0
        %v273 = vsel %vm262, %v231, 0
        %v276 = vsel %vm262, %v232, 0
        %v279 = vsel %vm262, %v233, 0
        %v282 = vsel %vm262, %v234, 0
        %v285 = vsel %vm262, %v235, 0
        %v288 = vsel %vm262, %v236, 0
        %v291 = vsel %vm262, %v237, 0
        %v294 = vsel %vm262, %v238, 0
        %v297 = vsel %vm262, %v239, 0
        %v300 = vsel %vm262, %v240, 0
        %v303 = vsel %vm262, %v241, 0
        %v306 = vsel %vm262, %v242, 0
        %v309 = vsel %vm262, %v243, 0
        %311 = vmatprep.subr.mxu0 0.0
        %312 = vmatpush1.msra.mxu0 0.0
        %313 = vmatprep.subr.mxu0 0.0
        %314 = vmatpush1.msra.mxu0 0.0
        %315 = vmatprep.subr.mxu0 0.0
        %316 = vmatpush1.msra.mxu0 0.0
        %317 = vmatprep.subr.mxu0 0.0
        %318 = vmatpush1.msra.mxu0 0.0
        %319 = vmatprep.subr.mxu0 0.0
        %320 = vmatpush1.msra.mxu0 0.0
        %321 = vmatprep.subr.mxu0 0.0
        %322 = vmatpush1.msra.mxu0 0.0
        %323 = vmatprep.subr.mxu0 0.0
        %324 = vmatpush1.msra.mxu0 0.0
        %325 = vmatprep.subr.mxu0 0.0
        %326 = vmatpush1.msra.mxu0 0.0
        %327 = vmatprep.subr.mxu0 0.0
        %328 = vmatpush1.msra.mxu0 0.0
        %329 = vmatprep.subr.mxu0 0.0
        %330 = vmatpush1.msra.mxu0 0.0
        %331 = vmatprep.subr.mxu0 0.0
        %332 = vmatpush1.msra.mxu0 0.0
        %333 = vmatprep.subr.mxu0 0.0
        %334 = vmatpush1.msra.mxu0 0.0
        %335 = vmatprep.subr.mxu0 0.0
        %336 = vmatpush1.msra.mxu0 0.0
        %337 = vmatprep.subr.mxu0 0.0
        %338 = vmatpush1.msra.mxu0 0.0
        %339 = vmatprep.subr.mxu0 0.0
        %340 = vmatpush1.msra.mxu0 %v245
        %341 = vmatprep.subr.mxu0 0.0
        %342 = vmatpush1.msra.mxu0 %v244
        %343 = vmatprep.subr.mxu0 0.0
        %344 = vmatpush2.msra.mxu0 0.0
        %345 = vmatprep.subr.mxu0 0.0
        %346 = vmatpush2.msra.mxu0 0.0
        %347 = vmatprep.subr.mxu0 0.0
        %348 = vmatpush2.msra.mxu0 0.0
        %349 = vmatprep.subr.mxu0 0.0
        %350 = vmatpush2.msra.mxu0 0.0
        %351 = vmatprep.subr.mxu0 0.0
        %352 = vmatpush2.msra.mxu0 0.0
        %353 = vmatprep.subr.mxu0 0.0
        %354 = vmatpush2.msra.mxu0 0.0
        %355 = vmatprep.subr.mxu0 0.0
        %356 = vmatpush2.msra.mxu0 0.0
        %357 = vmatprep.subr.mxu0 0.0
        %358 = vmatpush2.msra.mxu0 0.0
        %359 = vmatprep.subr.mxu0 0.0
        %360 = vmatpush2.msra.mxu0 0.0
        %361 = vmatprep.subr.mxu0 0.0
        %362 = vmatpush2.msra.mxu0 0.0
        %363 = vmatprep.subr.mxu0 0.0
        %364 = vmatpush2.msra.mxu0 0.0
        %365 = vmatprep.subr.mxu0 0.0
        %366 = vmatpush2.msra.mxu0 0.0
        %367 = vmatprep.subr.mxu0 0.0
        %368 = vmatpush2.msra.mxu0 0.0
        %369 = vmatprep.subr.mxu0 0.0
        %370 = vmatpush2.msra.mxu0 0.0
        %371 = vmatprep.subr.mxu0 0.0
        %372 = vmatpush2.msra.mxu0 0.0
        %373 = vmatprep.subr.mxu0 0.0
        %374 = vmatpush2.msra.mxu0 0.0
        %375 = vmatprep.mubr.f32.mxu0 0.0
        %376 = vmatmul.mubr.f32.gmra.mxu0 %v264
        %v377 = vpop.f32.mrf.mxu0
        %v378 = vadd.f32 %v261, %v377
        %v379 = vpop.f32.mrf.mxu0
        %380 = vmatprep.mubr.f32.mxu0 0.0
        %381 = vmatmul.mubr.f32.gmra.mxu0 %v267
        %v382 = vpop.f32.mrf.mxu0
        %v383 = vadd.f32 %v261, %v382
        %v384 = vpop.f32.mrf.mxu0
        %385 = vmatprep.mubr.f32.mxu0 0.0
        %386 = vmatmul.mubr.f32.gmra.mxu0 %v270
        %v387 = vpop.f32.mrf.mxu0
        %v388 = vadd.f32 %v261, %v387
        %v389 = vpop.f32.mrf.mxu0
        %390 = vmatprep.mubr.f32.mxu0 0.0
        %391 = vmatmul.mubr.f32.gmra.mxu0 %v273
        %v392 = vpop.f32.mrf.mxu0
        %v393 = vadd.f32 %v261, %v392
        %v394 = vpop.f32.mrf.mxu0
        %395 = vmatprep.mubr.f32.mxu0 0.0
        %396 = vmatmul.mubr.f32.gmra.mxu0 %v276
        %v397 = vpop.f32.mrf.mxu0
        %v398 = vadd.f32 %v261, %v397
        %v399 = vpop.f32.mrf.mxu0
        %400 = vmatprep.mubr.f32.mxu0 0.0
        %401 = vmatmul.mubr.f32.gmra.mxu0 %v279
        %v402 = vpop.f32.mrf.mxu0
        %v403 = vadd.f32 %v261, %v402
        %v404 = vpop.f32.mrf.mxu0
        %405 = vmatprep.mubr.f32.mxu0 0.0
        %406 = vmatmul.mubr.f32.gmra.mxu0 %v282
        %v407 = vpop.f32.mrf.mxu0
        %v408 = vadd.f32 %v261, %v407
        %v409 = vpop.f32.mrf.mxu0
        %410 = vmatprep.mubr.f32.mxu0 0.0
        %411 = vmatmul.mubr.f32.gmra.mxu0 %v285
        %v412 = vpop.f32.mrf.mxu0
        %v413 = vadd.f32 %v261, %v412
        %v414 = vpop.f32.mrf.mxu0
        %415 = vmatprep.mubr.f32.mxu0 0.0
        %416 = vmatmul.mubr.f32.gmra.mxu0 %v288
        %v417 = vpop.f32.mrf.mxu0
        %v418 = vadd.f32 %v261, %v417
        %v419 = vpop.f32.mrf.mxu0
        %420 = vmatprep.mubr.f32.mxu0 0.0
        %421 = vmatmul.mubr.f32.gmra.mxu0 %v291
        %v422 = vpop.f32.mrf.mxu0
        %v423 = vadd.f32 %v261, %v422
        %v424 = vpop.f32.mrf.mxu0
        %425 = vmatprep.mubr.f32.mxu0 0.0
        %426 = vmatmul.mubr.f32.gmra.mxu0 %v294
        %v427 = vpop.f32.mrf.mxu0
        %v428 = vadd.f32 %v261, %v427
        %v429 = vpop.f32.mrf.mxu0
        %430 = vmatprep.mubr.f32.mxu0 0.0
        %431 = vmatmul.mubr.f32.gmra.mxu0 %v297
        %v432 = vpop.f32.mrf.mxu0
        %v433 = vadd.f32 %v261, %v432
        %v434 = vpop.f32.mrf.mxu0
        %435 = vmatprep.mubr.f32.mxu0 0.0
        %436 = vmatmul.mubr.f32.gmra.mxu0 %v300
        %v437 = vpop.f32.mrf.mxu0
        %v438 = vadd.f32 %v261, %v437
        %v439 = vpop.f32.mrf.mxu0
        %440 = vmatprep.mubr.f32.mxu0 0.0
        %441 = vmatmul.mubr.f32.gmra.mxu0 %v303
        %v442 = vpop.f32.mrf.mxu0
        %v443 = vadd.f32 %v261, %v442
        %v444 = vpop.f32.mrf.mxu0
        %445 = vmatprep.mubr.f32.mxu0 0.0
        %446 = vmatmul.mubr.f32.gmra.mxu0 %v306
        %v447 = vpop.f32.mrf.mxu0
        %v448 = vadd.f32 %v261, %v447
        %v449 = vpop.f32.mrf.mxu0
        %450 = vmatprep.mubr.f32.mxu0 0.0
        %451 = vmatmul.mubr.f32.gmra.mxu0 %v309
        %v452 = vpop.f32.mrf.mxu0
        %v453 = vadd.f32 %v261, %v452
        %v454 = vpop.f32.mrf.mxu0
        %455 = vdwg.mxu0
        %v456 = vstv %s227
        %v457 = vmul.f32 %v456, %v247
        %v458 = vlaneseq
        %v459 = vshrl.u32 %v458, 7
        %v460 = vsub.s32 0, %v459
        %v461 = vrot.slane %v457, %v460
        %v462 = vadd.f32 %v378, %v461
        %v463 = vadd.f32 %v383, %v461
        %v464 = vadd.f32 %v388, %v461
        %v465 = vadd.f32 %v393, %v461
        %v466 = vadd.f32 %v398, %v461
        %v467 = vadd.f32 %v403, %v461
        %v468 = vadd.f32 %v408, %v461
        %v469 = vadd.f32 %v413, %v461
        %v470 = vadd.f32 %v418, %v461
        %v471 = vadd.f32 %v423, %v461
        %v472 = vadd.f32 %v428, %v461
        %v473 = vadd.f32 %v433, %v461
        %v474 = vadd.f32 %v438, %v461
        %v475 = vadd.f32 %v443, %v461
        %v476 = vadd.f32 %v448, %v461
        %v477 = vadd.f32 %v453, %v461
        %v478 = vtanh.pop %v462
        %v479 = vtanh.pop %v463
        %v480 = vtanh.pop %v464
        %v481 = vtanh.pop %v465
        %v482 = vtanh.pop %v466
        %v483 = vtanh.pop %v467
        %v484 = vtanh.pop %v468
        %v485 = vtanh.pop %v469
        %v486 = vtanh.pop %v470
        %v487 = vtanh.pop %v471
        %v488 = vtanh.pop %v472
        %v489 = vtanh.pop %v473
        %v490 = vtanh.pop %v474
        %v491 = vtanh.pop %v475
        %v492 = vtanh.pop %v476
        %v493 = vtanh.pop %v477
        %v494 = vmul.f32 %v478, %v478
        %v495 = vmul.f32 %v479, %v479
        %v496 = vmul.f32 %v480, %v480
        %v497 = vmul.f32 %v481, %v481
        %v498 = vmul.f32 %v482, %v482
        %v499 = vmul.f32 %v483, %v483
        %v500 = vmul.f32 %v484, %v484
        %v501 = vmul.f32 %v485, %v485
        %v502 = vmul.f32 %v486, %v486
        %v503 = vmul.f32 %v487, %v487
        %v504 = vmul.f32 %v488, %v488
        %v505 = vmul.f32 %v489, %v489
        %v506 = vmul.f32 %v490, %v490
        %v507 = vmul.f32 %v491, %v491
        %v508 = vmul.f32 %v492, %v492
        %v509 = vmul.f32 %v493, %v493
        %v510 = vsub.f32 1.0, %v494
        %v511 = vsub.f32 1.0, %v495
        %v512 = vsub.f32 1.0, %v496
        %v513 = vsub.f32 1.0, %v497
        %v514 = vsub.f32 1.0, %v498
        %v515 = vsub.f32 1.0, %v499
        %v516 = vsub.f32 1.0, %v500
        %v517 = vsub.f32 1.0, %v501
        %v518 = vsub.f32 1.0, %v502
        %v519 = vsub.f32 1.0, %v503
        %v520 = vsub.f32 1.0, %v504
        %v521 = vsub.f32 1.0, %v505
        %v522 = vsub.f32 1.0, %v506
        %v523 = vsub.f32 1.0, %v507
        %v524 = vsub.f32 1.0, %v508
        %v525 = vsub.f32 1.0, %v509
        %vm526 = vcmask 261120
        %v528 = vsel %vm526, %v510, 0
        %v531 = vsel %vm526, %v511, 0
        %v534 = vsel %vm526, %v512, 0
        %v537 = vsel %vm526, %v513, 0
        %v540 = vsel %vm526, %v514, 0
        %v543 = vsel %vm526, %v515, 0
        %v546 = vsel %vm526, %v516, 0
        %v549 = vsel %vm526, %v517, 0
        %v552 = vsel %vm526, %v518, 0
        %v555 = vsel %vm526, %v519, 0
        %v558 = vsel %vm526, %v520, 0
        %v561 = vsel %vm526, %v521, 0
        %v564 = vsel %vm526, %v522, 0
        %v567 = vsel %vm526, %v523, 0
        %v570 = vsel %vm526, %v524, 0
        %v573 = vsel %vm526, %v525, 0
        %575 = vmatprep.subr.mxu0 0.0
        %576 = vmatpush1.msra.mxu0 0.0
        %577 = vmatprep.subr.mxu0 0.0
        %578 = vmatpush1.msra.mxu0 0.0
        %579 = vmatprep.subr.mxu0 0.0
        %580 = vmatpush1.msra.mxu0 0.0
        %581 = vmatprep.subr.mxu0 0.0
        %582 = vmatpush1.msra.mxu0 0.0
        %583 = vmatprep.subr.mxu0 0.0
        %584 = vmatpush1.msra.mxu0 0.0
        %585 = vmatprep.subr.mxu0 0.0
        %586 = vmatpush1.msra.mxu0 0.0
        %587 = vmatprep.subr.mxu0 0.0
        %588 = vmatpush1.msra.mxu0 0.0
        %589 = vmatprep.subr.mxu0 0.0
        %590 = vmatpush1.msra.mxu0 0.0
        %591 = vmatprep.subr.mxu0 0.0
        %592 = vmatpush1.msra.mxu0 0.0
        %593 = vmatprep.subr.mxu0 0.0
        %594 = vmatpush1.msra.mxu0 0.0
        %595 = vmatprep.subr.mxu0 0.0
        %596 = vmatpush1.msra.mxu0 0.0
        %597 = vmatprep.subr.mxu0 0.0
        %598 = vmatpush1.msra.mxu0 0.0
        %599 = vmatprep.subr.mxu0 0.0
        %600 = vmatpush1.msra.mxu0 %v257
        %601 = vmatprep.subr.mxu0 0.0
        %602 = vmatpush1.msra.mxu0 %v256
        %603 = vmatprep.subr.mxu0 0.0
        %604 = vmatpush1.msra.mxu0 %v255
        %605 = vmatprep.subr.mxu0 0.0
        %606 = vmatpush1.msra.mxu0 %v254
        %607 = vmatprep.subr.mxu0 0.0
        %608 = vmatpush2.msra.mxu0 0.0
        %609 = vmatprep.subr.mxu0 0.0
        %610 = vmatpush2.msra.mxu0 0.0
        %611 = vmatprep.subr.mxu0 0.0
        %612 = vmatpush2.msra.mxu0 0.0
        %613 = vmatprep.subr.mxu0 0.0
        %614 = vmatpush2.msra.mxu0 0.0
        %615 = vmatprep.subr.mxu0 0.0
        %616 = vmatpush2.msra.mxu0 0.0
        %617 = vmatprep.subr.mxu0 0.0
        %618 = vmatpush2.msra.mxu0 0.0
        %619 = vmatprep.subr.mxu0 0.0
        %620 = vmatpush2.msra.mxu0 0.0
        %621 = vmatprep.subr.mxu0 0.0
        %622 = vmatpush2.msra.mxu0 0.0
        %623 = vmatprep.subr.mxu0 0.0
        %624 = vmatpush2.msra.mxu0 0.0
        %625 = vmatprep.subr.mxu0 0.0
        %626 = vmatpush2.msra.mxu0 0.0
        %627 = vmatprep.subr.mxu0 0.0
        %628 = vmatpush2.msra.mxu0 0.0
        %629 = vmatprep.subr.mxu0 0.0
        %630 = vmatpush2.msra.mxu0 0.0
        %631 = vmatprep.subr.mxu0 0.0
        %632 = vmatpush2.msra.mxu0 0.0
        %633 = vmatprep.subr.mxu0 0.0
        %634 = vmatpush2.msra.mxu0 0.0
        %635 = vmatprep.subr.mxu0 0.0
        %636 = vmatpush2.msra.mxu0 0.0
        %637 = vmatprep.subr.mxu0 0.0
        %638 = vmatpush2.msra.mxu0 0.0
        %639 = vmatprep.mubr.f32.mxu0 0.0
        %640 = vmatmul.mubr.f32.gmra.mxu0 %v528
        %v641 = vpop.f32.mrf.mxu0
        %v642 = vadd.f32 0.0, %v641
        %v643 = vpop.f32.mrf.mxu0
        %644 = vmatprep.mubr.f32.mxu0 0.0
        %645 = vmatmul.mubr.f32.gmra.mxu0 %v531
        %v646 = vpop.f32.mrf.mxu0
        %v647 = vadd.f32 0.0, %v646
        %v648 = vpop.f32.mrf.mxu0
        %649 = vmatprep.mubr.f32.mxu0 0.0
        %650 = vmatmul.mubr.f32.gmra.mxu0 %v534
        %v651 = vpop.f32.mrf.mxu0
        %v652 = vadd.f32 0.0, %v651
        %v653 = vpop.f32.mrf.mxu0
        %654 = vmatprep.mubr.f32.mxu0 0.0
        %655 = vmatmul.mubr.f32.gmra.mxu0 %v537
        %v656 = vpop.f32.mrf.mxu0
        %v657 = vadd.f32 0.0, %v656
        %v658 = vpop.f32.mrf.mxu0
        %659 = vmatprep.mubr.f32.mxu0 0.0
        %660 = vmatmul.mubr.f32.gmra.mxu0 %v540
        %v661 = vpop.f32.mrf.mxu0
        %v662 = vadd.f32 0.0, %v661
        %v663 = vpop.f32.mrf.mxu0
        %664 = vmatprep.mubr.f32.mxu0 0.0
        %665 = vmatmul.mubr.f32.gmra.mxu0 %v543
        %v666 = vpop.f32.mrf.mxu0
        %v667 = vadd.f32 0.0, %v666
        %v668 = vpop.f32.mrf.mxu0
        %669 = vmatprep.mubr.f32.mxu0 0.0
        %670 = vmatmul.mubr.f32.gmra.mxu0 %v546
        %v671 = vpop.f32.mrf.mxu0
        %v672 = vadd.f32 0.0, %v671
        %v673 = vpop.f32.mrf.mxu0
        %674 = vmatprep.mubr.f32.mxu0 0.0
        %675 = vmatmul.mubr.f32.gmra.mxu0 %v549
        %v676 = vpop.f32.mrf.mxu0
        %v677 = vadd.f32 0.0, %v676
        %v678 = vpop.f32.mrf.mxu0
        %679 = vmatprep.mubr.f32.mxu0 0.0
        %680 = vmatmul.mubr.f32.gmra.mxu0 %v552
        %v681 = vpop.f32.mrf.mxu0
        %v682 = vadd.f32 0.0, %v681
        %v683 = vpop.f32.mrf.mxu0
        %684 = vmatprep.mubr.f32.mxu0 0.0
        %685 = vmatmul.mubr.f32.gmra.mxu0 %v555
        %v686 = vpop.f32.mrf.mxu0
        %v687 = vadd.f32 0.0, %v686
        %v688 = vpop.f32.mrf.mxu0
        %689 = vmatprep.mubr.f32.mxu0 0.0
        %690 = vmatmul.mubr.f32.gmra.mxu0 %v558
        %v691 = vpop.f32.mrf.mxu0
        %v692 = vadd.f32 0.0, %v691
        %v693 = vpop.f32.mrf.mxu0
        %694 = vmatprep.mubr.f32.mxu0 0.0
        %695 = vmatmul.mubr.f32.gmra.mxu0 %v561
        %v696 = vpop.f32.mrf.mxu0
        %v697 = vadd.f32 0.0, %v696
        %v698 = vpop.f32.mrf.mxu0
        %699 = vmatprep.mubr.f32.mxu0 0.0
        %700 = vmatmul.mubr.f32.gmra.mxu0 %v564
        %v701 = vpop.f32.mrf.mxu0
        %v702 = vadd.f32 0.0, %v701
        %v703 = vpop.f32.mrf.mxu0
        %704 = vmatprep.mubr.f32.mxu0 0.0
        %705 = vmatmul.mubr.f32.gmra.mxu0 %v567
        %v706 = vpop.f32.mrf.mxu0
        %v707 = vadd.f32 0.0, %v706
        %v708 = vpop.f32.mrf.mxu0
        %709 = vmatprep.mubr.f32.mxu0 0.0
        %710 = vmatmul.mubr.f32.gmra.mxu0 %v570
        %v711 = vpop.f32.mrf.mxu0
        %v712 = vadd.f32 0.0, %v711
        %v713 = vpop.f32.mrf.mxu0
        %714 = vmatprep.mubr.f32.mxu0 0.0
        %715 = vmatmul.mubr.f32.gmra.mxu0 %v573
        %v716 = vpop.f32.mrf.mxu0
        %v717 = vadd.f32 0.0, %v716
        %v718 = vpop.f32.mrf.mxu0
        %719 = vdwg.mxu0
        %v721 = vsel %vm526, %v478, 0
        %v724 = vsel %vm526, %v479, 0
        %v727 = vsel %vm526, %v480, 0
        %v730 = vsel %vm526, %v481, 0
        %v733 = vsel %vm526, %v482, 0
        %v736 = vsel %vm526, %v483, 0
        %v739 = vsel %vm526, %v484, 0
        %v742 = vsel %vm526, %v485, 0
        %v745 = vsel %vm526, %v486, 0
        %v748 = vsel %vm526, %v487, 0
        %v751 = vsel %vm526, %v488, 0
        %v754 = vsel %vm526, %v489, 0
        %v757 = vsel %vm526, %v490, 0
        %v760 = vsel %vm526, %v491, 0
        %v763 = vsel %vm526, %v492, 0
        %v766 = vsel %vm526, %v493, 0
        %768 = vmatprep.subr.mxu0 0.0
        %769 = vmatpush1.msra.mxu0 0.0
        %770 = vmatprep.subr.mxu0 0.0
        %771 = vmatpush1.msra.mxu0 0.0
        %772 = vmatprep.subr.mxu0 0.0
        %773 = vmatpush1.msra.mxu0 0.0
        %774 = vmatprep.subr.mxu0 0.0
        %775 = vmatpush1.msra.mxu0 0.0
        %776 = vmatprep.subr.mxu0 0.0
        %777 = vmatpush1.msra.mxu0 0.0
        %778 = vmatprep.subr.mxu0 0.0
        %779 = vmatpush1.msra.mxu0 0.0
        %780 = vmatprep.subr.mxu0 0.0
        %781 = vmatpush1.msra.mxu0 0.0
        %782 = vmatprep.subr.mxu0 0.0
        %783 = vmatpush1.msra.mxu0 0.0
        %784 = vmatprep.subr.mxu0 0.0
        %785 = vmatpush1.msra.mxu0 0.0
        %786 = vmatprep.subr.mxu0 0.0
        %787 = vmatpush1.msra.mxu0 0.0
        %788 = vmatprep.subr.mxu0 0.0
        %789 = vmatpush1.msra.mxu0 0.0
        %790 = vmatprep.subr.mxu0 0.0
        %791 = vmatpush1.msra.mxu0 0.0
        %792 = vmatprep.subr.mxu0 0.0
        %793 = vmatpush1.msra.mxu0 %v252
        %794 = vmatprep.subr.mxu0 0.0
        %795 = vmatpush1.msra.mxu0 %v251
        %796 = vmatprep.subr.mxu0 0.0
        %797 = vmatpush1.msra.mxu0 %v250
        %798 = vmatprep.subr.mxu0 0.0
        %799 = vmatpush1.msra.mxu0 %v249
        %800 = vmatprep.subr.mxu0 0.0
        %801 = vmatpush2.msra.mxu0 0.0
        %802 = vmatprep.subr.mxu0 0.0
        %803 = vmatpush2.msra.mxu0 0.0
        %804 = vmatprep.subr.mxu0 0.0
        %805 = vmatpush2.msra.mxu0 0.0
        %806 = vmatprep.subr.mxu0 0.0
        %807 = vmatpush2.msra.mxu0 0.0
        %808 = vmatprep.subr.mxu0 0.0
        %809 = vmatpush2.msra.mxu0 0.0
        %810 = vmatprep.subr.mxu0 0.0
        %811 = vmatpush2.msra.mxu0 0.0
        %812 = vmatprep.subr.mxu0 0.0
        %813 = vmatpush2.msra.mxu0 0.0
        %814 = vmatprep.subr.mxu0 0.0
        %815 = vmatpush2.msra.mxu0 0.0
        %816 = vmatprep.subr.mxu0 0.0
        %817 = vmatpush2.msra.mxu0 0.0
        %818 = vmatprep.subr.mxu0 0.0
        %819 = vmatpush2.msra.mxu0 0.0
        %820 = vmatprep.subr.mxu0 0.0
        %821 = vmatpush2.msra.mxu0 0.0
        %822 = vmatprep.subr.mxu0 0.0
        %823 = vmatpush2.msra.mxu0 0.0
        %824 = vmatprep.subr.mxu0 0.0
        %825 = vmatpush2.msra.mxu0 0.0
        %826 = vmatprep.subr.mxu0 0.0
        %827 = vmatpush2.msra.mxu0 0.0
        %828 = vmatprep.subr.mxu0 0.0
        %829 = vmatpush2.msra.mxu0 0.0
        %830 = vmatprep.subr.mxu0 0.0
        %831 = vmatpush2.msra.mxu0 0.0
        %832 = vmatprep.mubr.f32.mxu0 0.0
        %833 = vmatmul.mubr.f32.gmra.mxu0 %v721
        %v834 = vpop.f32.mrf.mxu0
        %v835 = vadd.f32 %v642, %v834
        %v836 = vpop.f32.mrf.mxu0
        %837 = vmatprep.mubr.f32.mxu0 0.0
        %838 = vmatmul.mubr.f32.gmra.mxu0 %v724
        %v839 = vpop.f32.mrf.mxu0
        %v840 = vadd.f32 %v647, %v839
        %v841 = vpop.f32.mrf.mxu0
        %842 = vmatprep.mubr.f32.mxu0 0.0
        %843 = vmatmul.mubr.f32.gmra.mxu0 %v727
        %v844 = vpop.f32.mrf.mxu0
        %v845 = vadd.f32 %v652, %v844
        %v846 = vpop.f32.mrf.mxu0
        %847 = vmatprep.mubr.f32.mxu0 0.0
        %848 = vmatmul.mubr.f32.gmra.mxu0 %v730
        %v849 = vpop.f32.mrf.mxu0
        %v850 = vadd.f32 %v657, %v849
        %v851 = vpop.f32.mrf.mxu0
        %852 = vmatprep.mubr.f32.mxu0 0.0
        %853 = vmatmul.mubr.f32.gmra.mxu0 %v733
        %v854 = vpop.f32.mrf.mxu0
        %v855 = vadd.f32 %v662, %v854
        %v856 = vpop.f32.mrf.mxu0
        %857 = vmatprep.mubr.f32.mxu0 0.0
        %858 = vmatmul.mubr.f32.gmra.mxu0 %v736
        %v859 = vpop.f32.mrf.mxu0
        %v860 = vadd.f32 %v667, %v859
        %v861 = vpop.f32.mrf.mxu0
        %862 = vmatprep.mubr.f32.mxu0 0.0
        %863 = vmatmul.mubr.f32.gmra.mxu0 %v739
        %v864 = vpop.f32.mrf.mxu0
        %v865 = vadd.f32 %v672, %v864
        %v866 = vpop.f32.mrf.mxu0
        %867 = vmatprep.mubr.f32.mxu0 0.0
        %868 = vmatmul.mubr.f32.gmra.mxu0 %v742
        %v869 = vpop.f32.mrf.mxu0
        %v870 = vadd.f32 %v677, %v869
        %v871 = vpop.f32.mrf.mxu0
        %872 = vmatprep.mubr.f32.mxu0 0.0
        %873 = vmatmul.mubr.f32.gmra.mxu0 %v745
        %v874 = vpop.f32.mrf.mxu0
        %v875 = vadd.f32 %v682, %v874
        %v876 = vpop.f32.mrf.mxu0
        %877 = vmatprep.mubr.f32.mxu0 0.0
        %878 = vmatmul.mubr.f32.gmra.mxu0 %v748
        %v879 = vpop.f32.mrf.mxu0
        %v880 = vadd.f32 %v687, %v879
        %v881 = vpop.f32.mrf.mxu0
        %882 = vmatprep.mubr.f32.mxu0 0.0
        %883 = vmatmul.mubr.f32.gmra.mxu0 %v751
        %v884 = vpop.f32.mrf.mxu0
        %v885 = vadd.f32 %v692, %v884
        %v886 = vpop.f32.mrf.mxu0
        %887 = vmatprep.mubr.f32.mxu0 0.0
        %888 = vmatmul.mubr.f32.gmra.mxu0 %v754
        %v889 = vpop.f32.mrf.mxu0
        %v890 = vadd.f32 %v697, %v889
        %v891 = vpop.f32.mrf.mxu0
        %892 = vmatprep.mubr.f32.mxu0 0.0
        %893 = vmatmul.mubr.f32.gmra.mxu0 %v757
        %v894 = vpop.f32.mrf.mxu0
        %v895 = vadd.f32 %v702, %v894
        %v896 = vpop.f32.mrf.mxu0
        %897 = vmatprep.mubr.f32.mxu0 0.0
        %898 = vmatmul.mubr.f32.gmra.mxu0 %v760
        %v899 = vpop.f32.mrf.mxu0
        %v900 = vadd.f32 %v707, %v899
        %v901 = vpop.f32.mrf.mxu0
        %902 = vmatprep.mubr.f32.mxu0 0.0
        %903 = vmatmul.mubr.f32.gmra.mxu0 %v763
        %v904 = vpop.f32.mrf.mxu0
        %v905 = vadd.f32 %v712, %v904
        %v906 = vpop.f32.mrf.mxu0
        %907 = vmatprep.mubr.f32.mxu0 0.0
        %908 = vmatmul.mubr.f32.gmra.mxu0 %v766
        %v909 = vpop.f32.mrf.mxu0
        %v910 = vadd.f32 %v717, %v909
        %v911 = vpop.f32.mrf.mxu0
        %912 = vdwg.mxu0
        %v913 = vlaneseq
        %v914 = vshrl.u32 %v913, 7
        %v915 = vsub.s32 0, %v914
        %v916 = vrot.slane %v248, %v915
        %v917 = vadd.f32 %v835, %v916
        %v918 = vadd.f32 %v840, %v916
        %v919 = vadd.f32 %v845, %v916
        %v920 = vadd.f32 %v850, %v916
        %v921 = vadd.f32 %v855, %v916
        %v922 = vadd.f32 %v860, %v916
        %v923 = vadd.f32 %v865, %v916
        %v924 = vadd.f32 %v870, %v916
        %v925 = vadd.f32 %v875, %v916
        %v926 = vadd.f32 %v880, %v916
        %v927 = vadd.f32 %v885, %v916
        %v928 = vadd.f32 %v890, %v916
        %v929 = vadd.f32 %v895, %v916
        %v930 = vadd.f32 %v900, %v916
        %v931 = vadd.f32 %v905, %v916
        %v932 = vadd.f32 %v910, %v916
        %933 = vst [vmem:[%s219] sm:$0xff] %v917
        %934 = vst [vmem:[%s219 + $0x8] sm:$0xff] %v918
        %935 = vst [vmem:[%s219 + $0x10] sm:$0xff] %v919
        %936 = vst [vmem:[%s219 + $0x18] sm:$0xff] %v920
        %937 = vst [vmem:[%s219 + $0x20] sm:$0xff] %v921
        %938 = vst [vmem:[%s219 + $0x28] sm:$0xff] %v922
        %939 = vst [vmem:[%s219 + $0x30] sm:$0xff] %v923
        %940 = vst [vmem:[%s219 + $0x38] sm:$0xff] %v924
        %941 = vst [vmem:[%s219 + $0x40] sm:$0xff] %v925
        %942 = vst [vmem:[%s219 + $0x48] sm:$0xff] %v926
        %943 = vst [vmem:[%s219 + $0x50] sm:$0xff] %v927
        %944 = vst [vmem:[%s219 + $0x58] sm:$0xff] %v928
        %945 = vst [vmem:[%s219 + $0x60] sm:$0xff] %v929
        %946 = vst [vmem:[%s219 + $0x68] sm:$0xff] %v930
        %947 = vst [vmem:[%s219 + $0x70] sm:$0xff] %v931
        %948 = vst [vmem:[%s219 + $0x78] sm:$0xff] %v932
        %s949 = sand.u32 %s138, 1
        %s950 = scalar_lea.sflag [#allocation4], %s949
        %s951 = sand.u32 %s138, 1
        %s952 = smul.addr %s951, 128
        %s953 = scalar_lea.vmem [#allocation3], %s952
        // Predicated region
        $region41: #{tpu_custom_call.1} parent=39 // pred_check
          %p954 = pneg %p148
        $region42: #{tpu_custom_call.1} parent=39 // pred_check_branch
          %956 = sbr.rel (%p954) target = $region44
        $region43: #{tpu_custom_call.1} parent=39 // pred_region
          %s957 = smul.u32 16, %s20
          %s959 = ssub.s32 2048, 2048
          %960 = vsyncadd %s950, %s959
          %s961 = smul.addr %s957, 128
          %s962 = scalar_lea.hbm %s5, %s961
          %s963 = sshll.u32 %s953, 4
          %s964 = int_to_ptr.vmem [resolvable:$true] %s963
          %969 = dma.vmem_to_hbm [thread:$0]  %s964, 2048, %s962, %s950, 128, 128, 8
        $region44: #{tpu_custom_call.1} parent=39 // pred_fallthru
          _
      $region40: #{tpu_custom_call.1} parent=5 // pred_fallthru
        _
      %p970 = scmp.le.s32.totalorder 2, %s15
      // Predicated region
      $region45: #{tpu_custom_call.1} parent=5 // pred_check
        %p971 = pneg %p970
      $region46: #{tpu_custom_call.1} parent=5 // pred_check_branch
        %973 = sbr.rel (%p971) target = $region48
      $region47: #{tpu_custom_call.1} parent=5 // pred_region
        %s974 = ssub.s32 %s15, 2
        // Predicated region
        $region49: #{tpu_custom_call.1} parent=47 // pred_check
          %p975 = pneg %p154
        $region50: #{tpu_custom_call.1} parent=47 // pred_check_branch
          %977 = sbr.rel (%p975) target = $region52
        $region51: #{tpu_custom_call.1} parent=47 // pred_region
          %s978 = sand.u32 %s139, 1
          %s979 = scalar_lea.sflag [#allocation4], %s978
          %s980 = sand.u32 %s139, 1
          %s981 = smul.addr %s980, 128
          %s982 = scalar_lea.vmem [#allocation3], %s981
          %983 = dma.done %s979, 2048
        $region52: #{tpu_custom_call.1} parent=47 // pred_fallthru
          _
      $region48: #{tpu_custom_call.1} parent=5 // pred_fallthru
        _
    $region6: #{tpu_custom_call.1} parent=1 // loop_footer
      %s19 = sadd.s32 1, %s15
    $region7: #{tpu_custom_call.1} parent=1 // loop_footer_branch
      %14 = sbr.rel target = $region3
    $region8: #{tpu_custom_call.1} parent=1 // loop_exit
      _
    %984 = vsyncpa [#allocation4], 1
    %s985 = scalar_lea.sflag [#allocation4], 1
    %986 = vsyncpa %s985, 1

</llo_original>
